<compile_context>
chip_gen: v7x
topology: tpu7x:2x2x1
jax: 0.10.0
libtpu: 0.0.40
codegen_flags: <defaults>
</compile_context>

<pallas_src>
import jax
import jax.numpy as jnp
import numpy as np
from jax.experimental import pallas as pl
from jax.experimental.pallas import tpu as pltpu

_LANE = 128
_MIB = 1024 * 1024


def _round_up(x, m):
    return ((x + m - 1) // m) * m


def _pad_axis(a, axis, target):
    pad = target - a.shape[axis]
    if pad <= 0:
        return a
    widths = [(0, 0)] * a.ndim
    widths[axis] = (0, pad)
    return jnp.pad(a, widths)


def _softplus(x):
    # stable log(1 + exp(x)) — same formulation torch's BCEWithLogitsLoss uses.
    return jnp.maximum(x, 0.0) + jnp.log1p(jnp.exp(-jnp.abs(x)))


# -----------------------------------------------------------------------------
# Shared finalize: logits + ||d(sum logits)/dx||^2 for one (tb, Hp) z tile.
#   gram_ref holds the *pre-scaled* Gram  M' = diag(w2) @ W1x^T W1x @ diag(w2),
#   so the ReLU-gradient mask is a {0,1} tensor (no per-row w2 broadcast).
# -----------------------------------------------------------------------------
def _finalize_tile(z, w2_ref, gram_ref, out_ref):
    w2 = w2_ref[...]                                     # (1, Hp) f32
    h = jnp.maximum(z, 0.0)
    # N=1 contraction -> VPU mul + XLU reduce (keeps the MXU slot free).
    logits = jnp.sum(h * w2, axis=-1, keepdims=True)     # (tb, 1), b2 added in tail
    mask = (z > 0.0).astype(jnp.float32)                 # (tb, Hp) {0,1}
    gm = jnp.dot(mask, gram_ref[...], preferred_element_type=jnp.float32)
    gradsq = jnp.sum(gm * mask, axis=-1, keepdims=True)  # (tb, 1)
    # Lane-dense packed output: lane 0 = logits, lane 1 = gradsq.
    lane = jax.lax.broadcasted_iota(jnp.int32, out_ref.shape, 1)
    out_ref[...] = jnp.where(lane == 0, logits,
                             jnp.where(lane == 1, gradsq, 0.0))


# Resident-W1x path: grid = (batch tiles,), whole W1x lives in VMEM (constant
# block index => DMA'd once), no reduction-axis bookkeeping.
def _disc_kernel_resident(x_ref, z0_ref, w1x_ref, w2_ref, gram_ref, out_ref):
    z = z0_ref[...] + jnp.dot(x_ref[...], w1x_ref[...],
                              preferred_element_type=jnp.float32)
    _finalize_tile(z, w2_ref, gram_ref, out_ref)


# Tiled-k fallback for W1x that does not fit VMEM: grid = (batch tiles, k tiles),
# reduction axis last, f32 z accumulator in VMEM scratch.
def _disc_kernel_tiled(x_ref, z0_ref, w1x_ref, w2_ref, gram_ref, out_ref,
                       acc_ref):
    k = pl.program_id(1)

    @pl.when(k == 0)
    def _init():
        acc_ref[...] = z0_ref[...]

    acc_ref[...] += jnp.dot(x_ref[...], w1x_ref[...],
                            preferred_element_type=jnp.float32)

    @pl.when(k == pl.num_programs(1) - 1)
    def _fin():
        _finalize_tile(acc_ref[...], w2_ref, gram_ref, out_ref)


# -----------------------------------------------------------------------------
# Parameter padding (hidden dim -> multiple of 128 lanes), done once.
# -----------------------------------------------------------------------------
def pad_disc_params(params):
    hd = params["w1x"].shape[1]
    hp = _round_up(hd, _LANE)
    return {
        "w1x": _pad_axis(params["w1x"], 1, hp),
        "w1y": _pad_axis(params["w1y"], 1, hp),
        "b1": _pad_axis(params["b1"].reshape(1, -1), 1, hp),
        "w2": _pad_axis(params["w2"].reshape(1, -1), 1, hp),
        "b2": params["b2"].reshape(1, 1),
    }


# -----------------------------------------------------------------------------
# Wrapper: one pallas_call over the fused (real ++ fake) batch.
# -----------------------------------------------------------------------------
def disc_forward_fused(x_all, y_all, padded, *, tb=256, tk=1024,
                       matmul_dtype=jnp.float32):
    """Returns (logits, gradsq) of shape (Btot,) each; gradsq is the per-row
    squared L2 norm of d(sum logits)/dx."""
    btot, dx = x_all.shape
    hp = padded["w1x"].shape[1]
    itemsize = jnp.dtype(matmul_dtype).itemsize

    # bf16 batch tiles aligned to 16 sublanes (packed pairs), f32 to 8.
    b_align = 16 if itemsize < 4 else 8
    # NOTE(v7x): for production batch sizes pick tb so n_b >= 2, otherwise the
    # second TensorCore idles on the 'parallel' batch axis.
    tb = max(b_align, min(_round_up(tb, b_align), _round_up(btot, b_align)))
    b_pad = _round_up(btot, tb)
    n_b = b_pad // tb

    # --- one-shot, batch-independent XLA precompute (hoisted out of kernel) --
    w1x_f32 = padded["w1x"].astype(jnp.float32)
    w2 = padded["w2"].astype(jnp.float32)                      # (1, hp)
    # pre-scaled Gram  M' = diag(w2) @ (W1x^T W1x) @ diag(w2)  (f32 regardless
    # of matmul_dtype so the R1 gradient norm stays accurate).
    w_scaled = w1x_f32 * w2
    gram = jnp.dot(w_scaled.T, w_scaled, preferred_element_type=jnp.float32)
    # label/bias contribution to the pre-activation (tiny K=Dy matmul).
    z0 = (jnp.dot(y_all.astype(jnp.float32), padded["w1y"].astype(jnp.float32))
          + padded["b1"].astype(jnp.float32))                  # (btot, hp)
    z0 = _pad_axis(z0, 0, b_pad)

    x_p = _pad_axis(x_all, 0, b_pad).astype(matmul_dtype)

    # --- decide resident-W1x vs tiled-k path --------------------------------
    dx128 = _round_up(dx, _LANE)
    resident_bytes = (dx128 * hp * itemsize            # W1x (DMA'd once)
                      + 2 * tb * dx128 * itemsize      # x tile, double-buffered
                      + 2 * tb * hp * 4                # z0 tile
                      + hp * hp * 4                    # gram
                      + 2 * tb * _LANE * 4)            # out tile
    use_resident = resident_bytes <= 24 * _MIB         # safe on v7x's 64 MiB too

    flops = 2 * b_pad * dx128 * hp + 2 * b_pad * hp * hp

    if use_resident:
        dx_pad = dx128
        x_p = _pad_axis(x_p, 1, dx_pad)
        w1x = _pad_axis(padded["w1x"], 0, dx_pad).astype(matmul_dtype)
        vmem_limit = int(min(64 * _MIB, max(32 * _MIB, 2 * resident_bytes)))
        cost = pl.CostEstimate(
            flops=flops, transcendentals=0,
            bytes_accessed=(b_pad * dx_pad + dx_pad * hp) * itemsize
            + (b_pad * hp + hp * hp + b_pad * _LANE) * 4)
        out = pl.pallas_call(
            _disc_kernel_resident,
            out_shape=jax.ShapeDtypeStruct((b_pad, _LANE), jnp.float32),
            grid_spec=pltpu.PrefetchScalarGridSpec(
                num_scalar_prefetch=0,
                grid=(n_b,),
                in_specs=[
                    pl.BlockSpec((tb, dx_pad), lambda i: (i, 0)),    # x
                    pl.BlockSpec((tb, hp), lambda i: (i, 0)),        # z0
                    pl.BlockSpec((dx_pad, hp), lambda i: (0, 0)),    # W1x resident
                    pl.BlockSpec((1, hp), lambda i: (0, 0)),         # w2 (row)
                    pl.BlockSpec((hp, hp), lambda i: (0, 0)),        # Gram
                ],
                out_specs=pl.BlockSpec((tb, _LANE), lambda i: (i, 0)),
            ),
            compiler_params=pltpu.CompilerParams(
                dimension_semantics=("parallel",),
                vmem_limit_bytes=vmem_limit),
            cost_estimate=cost,
        )(x_p, z0, w1x, w2, gram)
    else:
        tk = _round_up(min(max(tk, _LANE), _round_up(dx, _LANE)), _LANE)
        dx_pad = _round_up(dx, tk)
        n_k = dx_pad // tk
        x_p = _pad_axis(x_p, 1, dx_pad)
        w1x = _pad_axis(padded["w1x"], 0, dx_pad).astype(matmul_dtype)
        tiled_bytes = (2 * tb * tk * itemsize + 2 * tk * hp * itemsize
                       + 2 * tb * hp * 4 + hp * hp * 4
                       + tb * hp * 4 + 2 * tb * _LANE * 4)
        vmem_limit = int(min(64 * _MIB, max(32 * _MIB, 2 * tiled_bytes)))
        cost = pl.CostEstimate(
            flops=flops, transcendentals=0,
            bytes_accessed=(b_pad * dx_pad + n_b * dx_pad * hp) * itemsize
            + (b_pad * hp + hp * hp + b_pad * _LANE) * 4)
        out = pl.pallas_call(
            _disc_kernel_tiled,
            out_shape=jax.ShapeDtypeStruct((b_pad, _LANE), jnp.float32),
            grid_spec=pltpu.PrefetchScalarGridSpec(
                num_scalar_prefetch=0,
                grid=(n_b, n_k),
                in_specs=[
                    pl.BlockSpec((tb, tk), lambda i, k: (i, k)),     # x
                    pl.BlockSpec((tb, hp), lambda i, k: (i, 0)),     # z0
                    pl.BlockSpec((tk, hp), lambda i, k: (k, 0)),     # W1x tile
                    pl.BlockSpec((1, hp), lambda i, k: (0, 0)),      # w2 (row)
                    pl.BlockSpec((hp, hp), lambda i, k: (0, 0)),     # Gram
                ],
                out_specs=pl.BlockSpec((tb, _LANE), lambda i, k: (i, 0)),
                scratch_shapes=[pltpu.VMEM((tb, hp), jnp.float32)],  # z acc
            ),
            compiler_params=pltpu.CompilerParams(
                dimension_semantics=("parallel", "arbitrary"),
                vmem_limit_bytes=vmem_limit),
            cost_estimate=cost,
        )(x_p, z0, w1x, w2, gram)

    b2 = padded["b2"].reshape(()).astype(jnp.float32)
    logits = out[:btot, 0] + b2        # b2 added in the cheap jnp tail
    gradsq = out[:btot, 1]
    return logits, gradsq


def adversarial_loss(padded_params, x_real, y_real, x_fake, y_fake, *,
                     tb=256, tk=1024, matmul_dtype=jnp.float32):
    b = x_real.shape[0]
    xr = x_real.reshape(b, -1)
    xf = x_fake.reshape(b, -1)
    # Fuse real + fake into one batch -> one launch, weights DMA'd once.
    x_all = jnp.concatenate([xr, xf], axis=0).astype(jnp.float32)
    y_all = jnp.concatenate([y_real, y_fake], axis=0).astype(jnp.float32)

    logits, gradsq = disc_forward_fused(
        x_all, y_all, padded_params, tb=tb, tk=tk, matmul_dtype=matmul_dtype)

    logits_r, logits_f = logits[:b], logits[b:]
    gsq_r = gradsq[:b]

    # O(B) scalar tail: plain jnp (BCE-with-logits == softplus of +/- logits).
    l_adv_d = jnp.mean(_softplus(-logits_r)) + jnp.mean(_softplus(logits_f))
    l_adv_g = jnp.mean(_softplus(-logits_f))
    r1_reg = 0.5 * jnp.mean(jnp.sqrt(gsq_r))
    return l_adv_d, l_adv_g, r1_reg


# -----------------------------------------------------------------------------
# Pure-JAX reference (jax.grad for the R1 gradient) for validation.
# -----------------------------------------------------------------------------
def _reference(params, x_real, y_real, x_fake, y_fake):
    def disc(xf, y):
        z = xf @ params["w1x"] + y @ params["w1y"] + params["b1"]
        return jnp.maximum(z, 0.0) @ params["w2"] + params["b2"]

    b = x_real.shape[0]
    xr = x_real.reshape(b, -1)
    xf = x_fake.reshape(b, -1)
    lr = disc(xr, y_real)
    lf = disc(xf, y_fake)
    grads = jax.grad(lambda x: disc(x, y_real).sum())(xr)
    ld = jnp.mean(_softplus(-lr)) + jnp.mean(_softplus(lf))
    lg = jnp.mean(_softplus(-lf))
    r1 = 0.5 * jnp.mean(jnp.linalg.norm(grads.reshape(b, -1), axis=1))
    return ld, lg, r1


if __name__ == "__main__":
    # small shapes consistent with the module: images (B,C,H,W), labels (B,Dy)
    B, C, H, W = 2, 4, 16, 16
    Dy, Hd = 8, 32
    Dx = C * H * W

    key = jax.random.PRNGKey(0)
    k_xr, k_yr, k_xf, k_yf, k1, k2, k3 = jax.random.split(key, 7)

    x_real = jax.random.normal(k_xr, (B, C, H, W), jnp.float32)
    y_real = jax.random.normal(k_yr, (B, Dy), jnp.float32)
    x_fake = jax.random.normal(k_xf, (B, C, H, W), jnp.float32)
    y_fake = jax.random.normal(k_yf, (B, Dy), jnp.float32)

    # deterministic synthetic discriminator parameters (unpadded, "nn.Module"-like)
    # TODO(synk): the real Discriminator class is not given in the spec; this
    # conditional MLP stands in for it with identical loss plumbing.
    params = {
        "w1x": 0.02 * jax.random.normal(k1, (Dx, Hd), jnp.float32),
        "w1y": 0.05 * jax.random.normal(k2, (Dy, Hd), jnp.float32),
        "b1": jnp.zeros((Hd,), jnp.float32),
        "w2": 0.1 * jax.random.normal(k3, (Hd,), jnp.float32),
        "b2": jnp.zeros((1,), jnp.float32),
    }
    padded = pad_disc_params(params)   # lane-padding done once at construction

    # NOTE: matmul_dtype=jnp.bfloat16 is supported on v5e/v6e/v7x (halves the
    # x / W1x HBM streams; accumulation and finalize stay f32, the Gram is
    # always built from f32 weights).  f32 here keeps the self-test tight —
    # loosen tolerances to ~1e-2 for the bf16 path.
    l_adv_d, l_adv_g, r1_reg = jax.block_until_ready(
        adversarial_loss(padded, x_real, y_real, x_fake, y_fake,
                         tb=256, tk=1024, matmul_dtype=jnp.float32))

    ref_d, ref_g, ref_r1 = _reference(params, x_real, y_real, x_fake, y_fake)
    np.testing.assert_allclose(np.asarray(l_adv_d), np.asarray(ref_d),
                               rtol=2e-3, atol=2e-3)
    np.testing.assert_allclose(np.asarray(l_adv_g), np.asarray(ref_g),
                               rtol=2e-3, atol=2e-3)
    np.testing.assert_allclose(np.asarray(r1_reg), np.asarray(ref_r1),
                               rtol=2e-3, atol=2e-3)

    print("KERNEL_OK")
</pallas_src>

<mosaic_0001>
module attributes {stable_mosaic.version = 11 : i64} {
  func.func @_disc_kernel_resident(%arg0: i32, %arg1: memref<8x1024xf32, #tpu.memory_space<vmem>>, %arg2: memref<8x128xf32, #tpu.memory_space<vmem>>, %arg3: memref<1024x128xf32, #tpu.memory_space<vmem>>, %arg4: memref<1x128xf32, #tpu.memory_space<vmem>>, %arg5: memref<128x128xf32, #tpu.memory_space<vmem>>, %arg6: memref<8x128xf32, #tpu.memory_space<vmem>>) attributes {dimension_semantics = [#tpu.dimension_semantics<parallel>], iteration_bounds = array<i64: 1>, scalar_prefetch = 0 : i64, scratch_operands = 0 : i64, tpu.core_type = #tpu.core_type<tc>, window_params = [{transform_indices = @transform_0, window_bounds = array<i64: 8, 1024>}, {transform_indices = @transform_1, window_bounds = array<i64: 8, 128>}, {pipeline_mode = #tpu.pipeline_mode<synchronous>, transform_indices = @transform_2, window_bounds = array<i64: 1024, 128>}, {pipeline_mode = #tpu.pipeline_mode<synchronous>, transform_indices = @transform_3, window_bounds = array<i64: 1, 128>}, {pipeline_mode = #tpu.pipeline_mode<synchronous>, transform_indices = @transform_4, window_bounds = array<i64: 128, 128>}, {transform_indices = @transform_5, window_bounds = array<i64: 8, 128>}]} {
    %c0 = arith.constant 0 : index
    %c0_0 = arith.constant 0 : index
    %0 = vector.load %arg2[%c0, %c0_0] : memref<8x128xf32, #tpu.memory_space<vmem>>, vector<8x128xf32>
    %c0_1 = arith.constant 0 : index
    %c0_2 = arith.constant 0 : index
    %1 = vector.load %arg1[%c0_1, %c0_2] : memref<8x1024xf32, #tpu.memory_space<vmem>>, vector<8x1024xf32>
    %c0_3 = arith.constant 0 : index
    %c0_4 = arith.constant 0 : index
    %2 = vector.load %arg3[%c0_3, %c0_4] : memref<1024x128xf32, #tpu.memory_space<vmem>>, vector<1024x128xf32>
    %cst = arith.constant dense<0.000000e+00> : vector<8x128xf32>
    %3 = tpu.matmul %1, %2, %cst {dimension_numbers = #tpu.dot_dimension_numbers<[1], [0], [0], [1], [0, 0, 1, 1], [], []>} : vector<8x1024xf32>, vector<1024x128xf32>, vector<8x128xf32> -> vector<8x128xf32>
    %4 = arith.addf %0, %3 : vector<8x128xf32>
    %c0_5 = arith.constant 0 : index
    %c0_6 = arith.constant 0 : index
    %5 = vector.load %arg4[%c0_5, %c0_6] : memref<1x128xf32, #tpu.memory_space<vmem>>, vector<1x128xf32>
    %cst_7 = arith.constant 0.000000e+00 : f32
    %6 = vector.broadcast %cst_7 : f32 to vector<8x128xf32>
    %7 = arith.maximumf %4, %6 : vector<8x128xf32>
    %8 = vector.broadcast %5 : vector<1x128xf32> to vector<8x128xf32>
    %9 = arith.mulf %7, %8 : vector<8x128xf32>
    %cst_8 = arith.constant dense<0.000000e+00> : vector<8xf32>
    %10 = vector.multi_reduction <add>, %9, %cst_8 [1] : vector<8x128xf32> to vector<8xf32>
    %11 = vector.shape_cast %10 : vector<8xf32> to vector<8x1xf32>
    %cst_9 = arith.constant 0.000000e+00 : f32
    %12 = vector.broadcast %cst_9 : f32 to vector<8x128xf32>
    %13 = arith.cmpf ogt, %4, %12 : vector<8x128xf32>
    %14 = arith.extui %13 : vector<8x128xi1> to vector<8x128xi32>
    %15 = arith.sitofp %14 : vector<8x128xi32> to vector<8x128xf32>
    %c0_10 = arith.constant 0 : index
    %c0_11 = arith.constant 0 : index
    %16 = vector.load %arg5[%c0_10, %c0_11] : memref<128x128xf32, #tpu.memory_space<vmem>>, vector<128x128xf32>
    %cst_12 = arith.constant dense<0.000000e+00> : vector<8x128xf32>
    %17 = tpu.matmul %15, %16, %cst_12 {dimension_numbers = #tpu.dot_dimension_numbers<[1], [0], [0], [1], [0, 0, 1, 1], [], []>} : vector<8x128xf32>, vector<128x128xf32>, vector<8x128xf32> -> vector<8x128xf32>
    %18 = arith.mulf %17, %15 : vector<8x128xf32>
    %cst_13 = arith.constant dense<0.000000e+00> : vector<8xf32>
    %19 = vector.multi_reduction <add>, %18, %cst_13 [1] : vector<8x128xf32> to vector<8xf32>
    %20 = vector.shape_cast %19 : vector<8xf32> to vector<8x1xf32>
    %21 = tpu.iota {dimensions = array<i32: 1>} : vector<8x128xi32>
    %c0_i32 = arith.constant 0 : i32
    %22 = vector.broadcast %c0_i32 : i32 to vector<8x128xi32>
    %23 = arith.cmpi eq, %21, %22 : vector<8x128xi32>
    %c1_i32 = arith.constant 1 : i32
    %24 = vector.broadcast %c1_i32 : i32 to vector<8x128xi32>
    %25 = arith.cmpi eq, %21, %24 : vector<8x128xi32>
    %cst_14 = arith.constant 0.000000e+00 : f32
    %26 = vector.shape_cast %20 : vector<8x1xf32> to vector<8x1xf32>
    %27 = vector.broadcast %26 : vector<8x1xf32> to vector<8x128xf32>
    %28 = vector.broadcast %cst_14 : f32 to vector<8x128xf32>
    %29 = arith.select %25, %27, %28 : vector<8x128xi1>, vector<8x128xf32>
    %30 = vector.shape_cast %11 : vector<8x1xf32> to vector<8x1xf32>
    %31 = vector.broadcast %30 : vector<8x1xf32> to vector<8x128xf32>
    %32 = arith.select %23, %31, %29 : vector<8x128xi1>, vector<8x128xf32>
    %c0_15 = arith.constant 0 : index
    %c0_16 = arith.constant 0 : index
    %33 = vector.load %arg6[%c0_15, %c0_16] : memref<8x128xf32, #tpu.memory_space<vmem>>, vector<8x128xf32>
    tpu.vector_store %arg6[%c0_15, %c0_16], %32 {strides = array<i32>} : memref<8x128xf32, #tpu.memory_space<vmem>>, vector<8x128xf32>,
    return
  }
  func.func @transform_0(%arg0: i32) -> (i32, i32) {
    %c0_i32 = arith.constant 0 : i32
    %c0_i32_0 = arith.constant 0 : i32
    return %arg0, %c0_i32 : i32, i32
  }
  func.func @transform_1(%arg0: i32) -> (i32, i32) {
    %c0_i32 = arith.constant 0 : i32
    %c0_i32_0 = arith.constant 0 : i32
    return %arg0, %c0_i32 : i32, i32
  }
  func.func @transform_2(%arg0: i32) -> (i32, i32) {
    %c0_i32 = arith.constant 0 : i32
    %c0_i32_0 = arith.constant 0 : i32
    %c0_i32_1 = arith.constant 0 : i32
    return %c0_i32, %c0_i32_0 : i32, i32
  }
  func.func @transform_3(%arg0: i32) -> (i32, i32) {
    %c0_i32 = arith.constant 0 : i32
    %c0_i32_0 = arith.constant 0 : i32
    %c0_i32_1 = arith.constant 0 : i32
    return %c0_i32, %c0_i32_0 : i32, i32
  }
  func.func @transform_4(%arg0: i32) -> (i32, i32) {
    %c0_i32 = arith.constant 0 : i32
    %c0_i32_0 = arith.constant 0 : i32
    %c0_i32_1 = arith.constant 0 : i32
    return %c0_i32, %c0_i32_0 : i32, i32
  }
  func.func @transform_5(%arg0: i32) -> (i32, i32) {
    %c0_i32 = arith.constant 0 : i32
    %c0_i32_0 = arith.constant 0 : i32
    return %arg0, %c0_i32 : i32, i32
  }
}

</mosaic_0001>

<llo_original>
// kernel: tpu_custom_call.1
$region0: #{tpu_custom_call.1}
  #allocation0 [shape = 'u32[]', space=smem, size = 0x4, offset = 0x4, fixed_abs, tag = 'smem constant byte address 0x4 - core index']
  #allocation1 [shape = 'u32[144,128]{1,0:T(1,128)}', space=vmem, size = 0x12000, scoped, tag = 'internal scratch']
  %s0 = inlined_call_operand.hbm [shape: f32[8,1024], index: 0, kind: input, shape index: {}]
  %s1 = inlined_call_operand.hbm [shape: f32[8,128], index: 1, kind: input, shape index: {}]
  %s2 = inlined_call_operand.hbm [shape: f32[1024,128], index: 2, kind: input, shape index: {}]
  %s3 = inlined_call_operand.vmem [shape: f32[1,128], index: 3, kind: input, shape index: {}]
  %s4 = inlined_call_operand.hbm [shape: f32[128,128], index: 4, kind: input, shape index: {}]
  %s5 = inlined_call_operand.hbm [shape: f32[8,128], index: 5, kind: output, shape index: {}]
  %s6 = sld [smem:[#allocation0]]
  $region46: #{tpu_custom_call.1} parent=0
    _
  %s8 = ssub.s32 1, %s6
  %s9 = scalar_select 0, %s8, %s6
  $region1: #{tpu_custom_call.1} parent=0
    #allocation2 [shape = 'u8[32768]{0}', space=vmem, size = 0x8000, scoped, tag = 'input window, operand 0, single buffered']
    #allocation3 [shape = 's32[1]{0}', space=sflag, size = 0x4, scoped, tag = 'scoped memory for tpu_custom_call.1']
    #allocation4 [shape = 's32[1]{0}', space=sflag, size = 0x4, scoped, tag = 'scoped memory for tpu_custom_call.1']
    #allocation5 [shape = 'u8[4096]{0}', space=vmem, size = 0x1000, scoped, tag = 'input window, operand 1, single buffered']
    #allocation6 [shape = 's32[1]{0}', space=sflag, size = 0x4, scoped, tag = 'scoped memory for tpu_custom_call.1']
    #allocation7 [shape = 'u8[524288]{0}', space=vmem, size = 0x80000, scoped, tag = 'input window, operand 2, single buffered']
    #allocation8 [shape = 'u8[65536]{0}', space=vmem, size = 0x10000, scoped, tag = 'input window, operand 4, single buffered']
    #allocation9 [shape = 's32[1]{0}', space=sflag, size = 0x4, scoped, tag = 'scoped memory for tpu_custom_call.1']
    #allocation10 [shape = 'u8[4096]{0}', space=vmem, size = 0x1000, scoped, tag = 'output window, operand 0, single buffered']
    %10 = vsyncpa [#allocation3], 0
    %11 = vsyncpa [#allocation6], 0
    %12 = vsyncpa [#allocation9], 0
    %13 = vsyncpa [#allocation4], 0
    // Predicated region
    $region2: #{tpu_custom_call.1} parent=1 // pred_check
      _
    $region3: #{tpu_custom_call.1} parent=1 // pred_check_branch
      %15 = sbr.rel (0) target = $region5
    $region4: #{tpu_custom_call.1} parent=1 // pred_region
      %s17 = ssub.s32 1024, 1024
      %18 = vsyncadd [#allocation3], %s17
      %s20 = sshll.u32 [#allocation2], 4
      %s21 = int_to_ptr.vmem [resolvable:$true] %s20
      %23 = dma.hbm_to_vmem [thread:$0]  %s0, 1024, %s21, [#allocation3]
    $region5: #{tpu_custom_call.1} parent=1 // pred_fallthru
      _
    // Predicated region
    $region6: #{tpu_custom_call.1} parent=1 // pred_check
      _
    $region7: #{tpu_custom_call.1} parent=1 // pred_check_branch
      %25 = sbr.rel (0) target = $region9
    $region8: #{tpu_custom_call.1} parent=1 // pred_region
      %s27 = ssub.s32 128, 128
      %28 = vsyncadd [#allocation6], %s27
      %s30 = sshll.u32 [#allocation5], 4
      %s31 = int_to_ptr.vmem [resolvable:$true] %s30
      %33 = dma.hbm_to_vmem [thread:$0]  %s1, 128, %s31, [#allocation6]
    $region9: #{tpu_custom_call.1} parent=1 // pred_fallthru
      _
    // Predicated region
    $region10: #{tpu_custom_call.1} parent=1 // pred_check
      _
    $region11: #{tpu_custom_call.1} parent=1 // pred_check_branch
      %35 = sbr.rel (0) target = $region13
    $region12: #{tpu_custom_call.1} parent=1 // pred_region
      %s37 = ssub.s32 16384, 16384
      %38 = vsyncadd [#allocation6], %s37
      %s39 = sshll.u32 [#allocation7], 4
      %s40 = int_to_ptr.vmem [resolvable:$true] %s39
      %45 = dma.hbm_to_vmem [thread:$0]  %s2, 16384, %s40, [#allocation6], 128, 128, 8
    $region13: #{tpu_custom_call.1} parent=1 // pred_fallthru
      _
    // Predicated region
    $region14: #{tpu_custom_call.1} parent=1 // pred_check
      _
    $region15: #{tpu_custom_call.1} parent=1 // pred_check_branch
      %47 = sbr.rel (0) target = $region17
    $region16: #{tpu_custom_call.1} parent=1 // pred_region
      _
    $region17: #{tpu_custom_call.1} parent=1 // pred_fallthru
      _
    // Predicated region
    $region18: #{tpu_custom_call.1} parent=1 // pred_check
      _
    $region19: #{tpu_custom_call.1} parent=1 // pred_check_branch
      %49 = sbr.rel (0) target = $region21
    $region20: #{tpu_custom_call.1} parent=1 // pred_region
      %s51 = ssub.s32 2048, 2048
      %52 = vsyncadd [#allocation9], %s51
      %s53 = sshll.u32 [#allocation8], 4
      %s54 = int_to_ptr.vmem [resolvable:$true] %s53
      %59 = dma.hbm_to_vmem [thread:$0]  %s4, 2048, %s54, [#allocation9], 128, 128, 8
    $region21: #{tpu_custom_call.1} parent=1 // pred_fallthru
      _
    // Predicated region
    $region22: #{tpu_custom_call.1} parent=1 // pred_check
      _
    $region23: #{tpu_custom_call.1} parent=1 // pred_check_branch
      %61 = sbr.rel (0) target = $region25
    $region24: #{tpu_custom_call.1} parent=1 // pred_region
      %62 = dma.done [#allocation3], 1024
    $region25: #{tpu_custom_call.1} parent=1 // pred_fallthru
      _
    // Predicated region
    $region26: #{tpu_custom_call.1} parent=1 // pred_check
      _
    $region27: #{tpu_custom_call.1} parent=1 // pred_check_branch
      %64 = sbr.rel (0) target = $region29
    $region28: #{tpu_custom_call.1} parent=1 // pred_region
      %65 = dma.done [#allocation6], 128
    $region29: #{tpu_custom_call.1} parent=1 // pred_fallthru
      _
    // Predicated region
    $region30: #{tpu_custom_call.1} parent=1 // pred_check
      _
    $region31: #{tpu_custom_call.1} parent=1 // pred_check_branch
      %67 = sbr.rel (0) target = $region33
    $region32: #{tpu_custom_call.1} parent=1 // pred_region
      %68 = dma.done [#allocation6], 16384
    $region33: #{tpu_custom_call.1} parent=1 // pred_fallthru
      _
    // Predicated region
    $region34: #{tpu_custom_call.1} parent=1 // pred_check
      _
    $region35: #{tpu_custom_call.1} parent=1 // pred_check_branch
      %70 = sbr.rel (0) target = $region37
    $region36: #{tpu_custom_call.1} parent=1 // pred_region
      %71 = dma.done [#allocation9], 2048
    $region37: #{tpu_custom_call.1} parent=1 // pred_fallthru
      _
    %v72 = vld [vmem:[#allocation5] sm:$0xff]
    %v73 = vld [vmem:[#allocation2] sm:$0xff]
    %v74 = vld [vmem:[#allocation2 + $0x8] sm:$0xff]
    %v75 = vld [vmem:[#allocation2 + $0x10] sm:$0xff]
    %v76 = vld [vmem:[#allocation2 + $0x18] sm:$0xff]
    %v77 = vld [vmem:[#allocation2 + $0x20] sm:$0xff]
    %v78 = vld [vmem:[#allocation2 + $0x28] sm:$0xff]
    %v79 = vld [vmem:[#allocation2 + $0x30] sm:$0xff]
    %v80 = vld [vmem:[#allocation2 + $0x38] sm:$0xff]
    %v81 = vld [vmem:[#allocation7] sm:$0xff]
    %v82 = vld [vmem:[#allocation7 + $0x8] sm:$0xff]
    %v83 = vld [vmem:[#allocation7 + $0x10] sm:$0xff]
    %v84 = vld [vmem:[#allocation7 + $0x18] sm:$0xff]
    %v85 = vld [vmem:[#allocation7 + $0x20] sm:$0xff]
    %v86 = vld [vmem:[#allocation7 + $0x28] sm:$0xff]
    %v87 = vld [vmem:[#allocation7 + $0x30] sm:$0xff]
    %v88 = vld [vmem:[#allocation7 + $0x38] sm:$0xff]
    %v89 = vld [vmem:[#allocation7 + $0x40] sm:$0xff]
    %v90 = vld [vmem:[#allocation7 + $0x48] sm:$0xff]
    %v91 = vld [vmem:[#allocation7 + $0x50] sm:$0xff]
    %v92 = vld [vmem:[#allocation7 + $0x58] sm:$0xff]
    %v93 = vld [vmem:[#allocation7 + $0x60] sm:$0xff]
    %v94 = vld [vmem:[#allocation7 + $0x68] sm:$0xff]
    %v95 = vld [vmem:[#allocation7 + $0x70] sm:$0xff]
    %v96 = vld [vmem:[#allocation7 + $0x78] sm:$0xff]
    %v97 = vld [vmem:[#allocation7 + $0x80] sm:$0xff]
    %v98 = vld [vmem:[#allocation7 + $0x88] sm:$0xff]
    %v99 = vld [vmem:[#allocation7 + $0x90] sm:$0xff]
    %v100 = vld [vmem:[#allocation7 + $0x98] sm:$0xff]
    %v101 = vld [vmem:[#allocation7 + $0xa0] sm:$0xff]
    %v102 = vld [vmem:[#allocation7 + $0xa8] sm:$0xff]
    %v103 = vld [vmem:[#allocation7 + $0xb0] sm:$0xff]
    %v104 = vld [vmem:[#allocation7 + $0xb8] sm:$0xff]
    %v105 = vld [vmem:[#allocation7 + $0xc0] sm:$0xff]
    %v106 = vld [vmem:[#allocation7 + $0xc8] sm:$0xff]
    %v107 = vld [vmem:[#allocation7 + $0xd0] sm:$0xff]
    %v108 = vld [vmem:[#allocation7 + $0xd8] sm:$0xff]
    %v109 = vld [vmem:[#allocation7 + $0xe0] sm:$0xff]
    %v110 = vld [vmem:[#allocation7 + $0xe8] sm:$0xff]
    %v111 = vld [vmem:[#allocation7 + $0xf0] sm:$0xff]
    %v112 = vld [vmem:[#allocation7 + $0xf8] sm:$0xff]
    %v113 = vld [vmem:[#allocation7 + $0x100] sm:$0xff]
    %v114 = vld [vmem:[#allocation7 + $0x108] sm:$0xff]
    %v115 = vld [vmem:[#allocation7 + $0x110] sm:$0xff]
    %v116 = vld [vmem:[#allocation7 + $0x118] sm:$0xff]
    %v117 = vld [vmem:[#allocation7 + $0x120] sm:$0xff]
    %v118 = vld [vmem:[#allocation7 + $0x128] sm:$0xff]
    %v119 = vld [vmem:[#allocation7 + $0x130] sm:$0xff]
    %v120 = vld [vmem:[#allocation7 + $0x138] sm:$0xff]
    %v121 = vld [vmem:[#allocation7 + $0x140] sm:$0xff]
    %v122 = vld [vmem:[#allocation7 + $0x148] sm:$0xff]
    %v123 = vld [vmem:[#allocation7 + $0x150] sm:$0xff]
    %v124 = vld [vmem:[#allocation7 + $0x158] sm:$0xff]
    %v125 = vld [vmem:[#allocation7 + $0x160] sm:$0xff]
    %v126 = vld [vmem:[#allocation7 + $0x168] sm:$0xff]
    %v127 = vld [vmem:[#allocation7 + $0x170] sm:$0xff]
    %v128 = vld [vmem:[#allocation7 + $0x178] sm:$0xff]
    %v129 = vld [vmem:[#allocation7 + $0x180] sm:$0xff]
    %v130 = vld [vmem:[#allocation7 + $0x188] sm:$0xff]
    %v131 = vld [vmem:[#allocation7 + $0x190] sm:$0xff]
    %v132 = vld [vmem:[#allocation7 + $0x198] sm:$0xff]
    %v133 = vld [vmem:[#allocation7 + $0x1a0] sm:$0xff]
    %v134 = vld [vmem:[#allocation7 + $0x1a8] sm:$0xff]
    %v135 = vld [vmem:[#allocation7 + $0x1b0] sm:$0xff]
    %v136 = vld [vmem:[#allocation7 + $0x1b8] sm:$0xff]
    %v137 = vld [vmem:[#allocation7 + $0x1c0] sm:$0xff]
    %v138 = vld [vmem:[#allocation7 + $0x1c8] sm:$0xff]
    %v139 = vld [vmem:[#allocation7 + $0x1d0] sm:$0xff]
    %v140 = vld [vmem:[#allocation7 + $0x1d8] sm:$0xff]
    %v141 = vld [vmem:[#allocation7 + $0x1e0] sm:$0xff]
    %v142 = vld [vmem:[#allocation7 + $0x1e8] sm:$0xff]
    %v143 = vld [vmem:[#allocation7 + $0x1f0] sm:$0xff]
    %v144 = vld [vmem:[#allocation7 + $0x1f8] sm:$0xff]
    %v145 = vld [vmem:[#allocation7 + $0x200] sm:$0xff]
    %v146 = vld [vmem:[#allocation7 + $0x208] sm:$0xff]
    %v147 = vld [vmem:[#allocation7 + $0x210] sm:$0xff]
    %v148 = vld [vmem:[#allocation7 + $0x218] sm:$0xff]
    %v149 = vld [vmem:[#allocation7 + $0x220] sm:$0xff]
    %v150 = vld [vmem:[#allocation7 + $0x228] sm:$0xff]
    %v151 = vld [vmem:[#allocation7 + $0x230] sm:$0xff]
    %v152 = vld [vmem:[#allocation7 + $0x238] sm:$0xff]
    %v153 = vld [vmem:[#allocation7 + $0x240] sm:$0xff]
    %v154 = vld [vmem:[#allocation7 + $0x248] sm:$0xff]
    %v155 = vld [vmem:[#allocation7 + $0x250] sm:$0xff]
    %v156 = vld [vmem:[#allocation7 + $0x258] sm:$0xff]
    %v157 = vld [vmem:[#allocation7 + $0x260] sm:$0xff]
    %v158 = vld [vmem:[#allocation7 + $0x268] sm:$0xff]
    %v159 = vld [vmem:[#allocation7 + $0x270] sm:$0xff]
    %v160 = vld [vmem:[#allocation7 + $0x278] sm:$0xff]
    %v161 = vld [vmem:[#allocation7 + $0x280] sm:$0xff]
    %v162 = vld [vmem:[#allocation7 + $0x288] sm:$0xff]
    %v163 = vld [vmem:[#allocation7 + $0x290] sm:$0xff]
    %v164 = vld [vmem:[#allocation7 + $0x298] sm:$0xff]
    %v165 = vld [vmem:[#allocation7 + $0x2a0] sm:$0xff]
    %v166 = vld [vmem:[#allocation7 + $0x2a8] sm:$0xff]
    %v167 = vld [vmem:[#allocation7 + $0x2b0] sm:$0xff]
    %v168 = vld [vmem:[#allocation7 + $0x2b8] sm:$0xff]
    %v169 = vld [vmem:[#allocation7 + $0x2c0] sm:$0xff]
    %v170 = vld [vmem:[#allocation7 + $0x2c8] sm:$0xff]
    %v171 = vld [vmem:[#allocation7 + $0x2d0] sm:$0xff]
    %v172 = vld [vmem:[#allocation7 + $0x2d8] sm:$0xff]
    %v173 = vld [vmem:[#allocation7 + $0x2e0] sm:$0xff]
    %v174 = vld [vmem:[#allocation7 + $0x2e8] sm:$0xff]
    %v175 = vld [vmem:[#allocation7 + $0x2f0] sm:$0xff]
    %v176 = vld [vmem:[#allocation7 + $0x2f8] sm:$0xff]
    %v177 = vld [vmem:[#allocation7 + $0x300] sm:$0xff]
    %v178 = vld [vmem:[#allocation7 + $0x308] sm:$0xff]
    %v179 = vld [vmem:[#allocation7 + $0x310] sm:$0xff]
    %v180 = vld [vmem:[#allocation7 + $0x318] sm:$0xff]
    %v181 = vld [vmem:[#allocation7 + $0x320] sm:$0xff]
    %v182 = vld [vmem:[#allocation7 + $0x328] sm:$0xff]
    %v183 = vld [vmem:[#allocation7 + $0x330] sm:$0xff]
    %v184 = vld [vmem:[#allocation7 + $0x338] sm:$0xff]
    %v185 = vld [vmem:[#allocation7 + $0x340] sm:$0xff]
    %v186 = vld [vmem:[#allocation7 + $0x348] sm:$0xff]
    %v187 = vld [vmem:[#allocation7 + $0x350] sm:$0xff]
    %v188 = vld [vmem:[#allocation7 + $0x358] sm:$0xff]
    %v189 = vld [vmem:[#allocation7 + $0x360] sm:$0xff]
    %v190 = vld [vmem:[#allocation7 + $0x368] sm:$0xff]
    %v191 = vld [vmem:[#allocation7 + $0x370] sm:$0xff]
    %v192 = vld [vmem:[#allocation7 + $0x378] sm:$0xff]
    %v193 = vld [vmem:[#allocation7 + $0x380] sm:$0xff]
    %v194 = vld [vmem:[#allocation7 + $0x388] sm:$0xff]
    %v195 = vld [vmem:[#allocation7 + $0x390] sm:$0xff]
    %v196 = vld [vmem:[#allocation7 + $0x398] sm:$0xff]
    %v197 = vld [vmem:[#allocation7 + $0x3a0] sm:$0xff]
    %v198 = vld [vmem:[#allocation7 + $0x3a8] sm:$0xff]
    %v199 = vld [vmem:[#allocation7 + $0x3b0] sm:$0xff]
    %v200 = vld [vmem:[#allocation7 + $0x3b8] sm:$0xff]
    %v201 = vld [vmem:[#allocation7 + $0x3c0] sm:$0xff]
    %v202 = vld [vmem:[#allocation7 + $0x3c8] sm:$0xff]
    %v203 = vld [vmem:[#allocation7 + $0x3d0] sm:$0xff]
    %v204 = vld [vmem:[#allocation7 + $0x3d8] sm:$0xff]
    %v205 = vld [vmem:[#allocation7 + $0x3e0] sm:$0xff]
    %v206 = vld [vmem:[#allocation7 + $0x3e8] sm:$0xff]
    %v207 = vld [vmem:[#allocation7 + $0x3f0] sm:$0xff]
    %v208 = vld [vmem:[#allocation7 + $0x3f8] sm:$0xff]
    %209 = vmatprep.subr.mxu0 0.0
    %210 = vmatpush1.msra.mxu0 %v81
    %211 = vmatprep.subr.mxu0 0.0
    %212 = vmatpush1.msra.mxu0 %v82
    %213 = vmatprep.subr.mxu0 0.0
    %214 = vmatpush1.msra.mxu0 %v83
    %215 = vmatprep.subr.mxu0 0.0
    %216 = vmatpush1.msra.mxu0 %v84
    %217 = vmatprep.subr.mxu0 0.0
    %218 = vmatpush1.msra.mxu0 %v85
    %219 = vmatprep.subr.mxu0 0.0
    %220 = vmatpush1.msra.mxu0 %v86
    %221 = vmatprep.subr.mxu0 0.0
    %222 = vmatpush1.msra.mxu0 %v87
    %223 = vmatprep.subr.mxu0 0.0
    %224 = vmatpush1.msra.mxu0 %v88
    %225 = vmatprep.subr.mxu0 0.0
    %226 = vmatpush1.msra.mxu0 %v89
    %227 = vmatprep.subr.mxu0 0.0
    %228 = vmatpush1.msra.mxu0 %v90
    %229 = vmatprep.subr.mxu0 0.0
    %230 = vmatpush1.msra.mxu0 %v91
    %231 = vmatprep.subr.mxu0 0.0
    %232 = vmatpush1.msra.mxu0 %v92
    %233 = vmatprep.subr.mxu0 0.0
    %234 = vmatpush1.msra.mxu0 %v93
    %235 = vmatprep.subr.mxu0 0.0
    %236 = vmatpush1.msra.mxu0 %v94
    %237 = vmatprep.subr.mxu0 0.0
    %238 = vmatpush1.msra.mxu0 %v95
    %239 = vmatprep.subr.mxu0 0.0
    %240 = vmatpush1.msra.mxu0 %v96
    %241 = vmatprep.subr.mxu0 0.0
    %242 = vmatpush1.msra.mxu0 %v97
    %243 = vmatprep.subr.mxu0 0.0
    %244 = vmatpush1.msra.mxu0 %v98
    %245 = vmatprep.subr.mxu0 0.0
    %246 = vmatpush1.msra.mxu0 %v99
    %247 = vmatprep.subr.mxu0 0.0
    %248 = vmatpush1.msra.mxu0 %v100
    %249 = vmatprep.subr.mxu0 0.0
    %250 = vmatpush1.msra.mxu0 %v101
    %251 = vmatprep.subr.mxu0 0.0
    %252 = vmatpush1.msra.mxu0 %v102
    %253 = vmatprep.subr.mxu0 0.0
    %254 = vmatpush1.msra.mxu0 %v103
    %255 = vmatprep.subr.mxu0 0.0
    %256 = vmatpush1.msra.mxu0 %v104
    %257 = vmatprep.subr.mxu0 0.0
    %258 = vmatpush1.msra.mxu0 %v105
    %259 = vmatprep.subr.mxu0 0.0
    %260 = vmatpush1.msra.mxu0 %v106
    %261 = vmatprep.subr.mxu0 0.0
    %262 = vmatpush1.msra.mxu0 %v107
    %263 = vmatprep.subr.mxu0 0.0
    %264 = vmatpush1.msra.mxu0 %v108
    %265 = vmatprep.subr.mxu0 0.0
    %266 = vmatpush1.msra.mxu0 %v109
    %267 = vmatprep.subr.mxu0 0.0
    %268 = vmatpush1.msra.mxu0 %v110
    %269 = vmatprep.subr.mxu0 0.0
    %270 = vmatpush1.msra.mxu0 %v111
    %271 = vmatprep.subr.mxu0 0.0
    %272 = vmatpush1.msra.mxu0 %v112
    %273 = vmatprep.mubr.f32.mxu0 %v74
    %274 = vmatmul.mubr.f32.gmra.mrb[0].mxu0 %v73
    %v275 = vpop.f32.mrb[0].mxu0
    %v276 = vadd.f32 0.0, %v275
    %v277 = vpop.f32.mrb[0].mxu0
    %278 = vdwg.mxu0
    %279 = vmatprep.subr.mxu0 0.0
    %280 = vmatpush1.msra.mxu0 %v113
    %281 = vmatprep.subr.mxu0 0.0
    %282 = vmatpush1.msra.mxu0 %v114
    %283 = vmatprep.subr.mxu0 0.0
    %284 = vmatpush1.msra.mxu0 %v115
    %285 = vmatprep.subr.mxu0 0.0
    %286 = vmatpush1.msra.mxu0 %v116
    %287 = vmatprep.subr.mxu0 0.0
    %288 = vmatpush1.msra.mxu0 %v117
    %289 = vmatprep.subr.mxu0 0.0
    %290 = vmatpush1.msra.mxu0 %v118
    %291 = vmatprep.subr.mxu0 0.0
    %292 = vmatpush1.msra.mxu0 %v119
    %293 = vmatprep.subr.mxu0 0.0
    %294 = vmatpush1.msra.mxu0 %v120
    %295 = vmatprep.subr.mxu0 0.0
    %296 = vmatpush1.msra.mxu0 %v121
    %297 = vmatprep.subr.mxu0 0.0
    %298 = vmatpush1.msra.mxu0 %v122
    %299 = vmatprep.subr.mxu0 0.0
    %300 = vmatpush1.msra.mxu0 %v123
    %301 = vmatprep.subr.mxu0 0.0
    %302 = vmatpush1.msra.mxu0 %v124
    %303 = vmatprep.subr.mxu0 0.0
    %304 = vmatpush1.msra.mxu0 %v125
    %305 = vmatprep.subr.mxu0 0.0
    %306 = vmatpush1.msra.mxu0 %v126
    %307 = vmatprep.subr.mxu0 0.0
    %308 = vmatpush1.msra.mxu0 %v127
    %309 = vmatprep.subr.mxu0 0.0
    %310 = vmatpush1.msra.mxu0 %v128
    %311 = vmatprep.subr.mxu0 0.0
    %312 = vmatpush1.msra.mxu0 %v129
    %313 = vmatprep.subr.mxu0 0.0
    %314 = vmatpush1.msra.mxu0 %v130
    %315 = vmatprep.subr.mxu0 0.0
    %316 = vmatpush1.msra.mxu0 %v131
    %317 = vmatprep.subr.mxu0 0.0
    %318 = vmatpush1.msra.mxu0 %v132
    %319 = vmatprep.subr.mxu0 0.0
    %320 = vmatpush1.msra.mxu0 %v133
    %321 = vmatprep.subr.mxu0 0.0
    %322 = vmatpush1.msra.mxu0 %v134
    %323 = vmatprep.subr.mxu0 0.0
    %324 = vmatpush1.msra.mxu0 %v135
    %325 = vmatprep.subr.mxu0 0.0
    %326 = vmatpush1.msra.mxu0 %v136
    %327 = vmatprep.subr.mxu0 0.0
    %328 = vmatpush1.msra.mxu0 %v137
    %329 = vmatprep.subr.mxu0 0.0
    %330 = vmatpush1.msra.mxu0 %v138
    %331 = vmatprep.subr.mxu0 0.0
    %332 = vmatpush1.msra.mxu0 %v139
    %333 = vmatprep.subr.mxu0 0.0
    %334 = vmatpush1.msra.mxu0 %v140
    %335 = vmatprep.subr.mxu0 0.0
    %336 = vmatpush1.msra.mxu0 %v141
    %337 = vmatprep.subr.mxu0 0.0
    %338 = vmatpush1.msra.mxu0 %v142
    %339 = vmatprep.subr.mxu0 0.0
    %340 = vmatpush1.msra.mxu0 %v143
    %341 = vmatprep.subr.mxu0 0.0
    %342 = vmatpush1.msra.mxu0 %v144
    %343 = vmatprep.mubr.f32.mxu0 %v76
    %344 = vmatmul.mubr.f32.gmra.mrb[0].mxu0 %v75
    %v345 = vpop.f32.mrb[0].mxu0
    %v346 = vadd.f32 %v276, %v345
    %v347 = vpop.f32.mrb[0].mxu0
    %348 = vdwg.mxu0
    %349 = vmatprep.subr.mxu0 0.0
    %350 = vmatpush1.msra.mxu0 %v145
    %351 = vmatprep.subr.mxu0 0.0
    %352 = vmatpush1.msra.mxu0 %v146
    %353 = vmatprep.subr.mxu0 0.0
    %354 = vmatpush1.msra.mxu0 %v147
    %355 = vmatprep.subr.mxu0 0.0
    %356 = vmatpush1.msra.mxu0 %v148
    %357 = vmatprep.subr.mxu0 0.0
    %358 = vmatpush1.msra.mxu0 %v149
    %359 = vmatprep.subr.mxu0 0.0
    %360 = vmatpush1.msra.mxu0 %v150
    %361 = vmatprep.subr.mxu0 0.0
    %362 = vmatpush1.msra.mxu0 %v151
    %363 = vmatprep.subr.mxu0 0.0
    %364 = vmatpush1.msra.mxu0 %v152
    %365 = vmatprep.subr.mxu0 0.0
    %366 = vmatpush1.msra.mxu0 %v153
    %367 = vmatprep.subr.mxu0 0.0
    %368 = vmatpush1.msra.mxu0 %v154
    %369 = vmatprep.subr.mxu0 0.0
    %370 = vmatpush1.msra.mxu0 %v155
    %371 = vmatprep.subr.mxu0 0.0
    %372 = vmatpush1.msra.mxu0 %v156
    %373 = vmatprep.subr.mxu0 0.0
    %374 = vmatpush1.msra.mxu0 %v157
    %375 = vmatprep.subr.mxu0 0.0
    %376 = vmatpush1.msra.mxu0 %v158
    %377 = vmatprep.subr.mxu0 0.0
    %378 = vmatpush1.msra.mxu0 %v159
    %379 = vmatprep.subr.mxu0 0.0
    %380 = vmatpush1.msra.mxu0 %v160
    %381 = vmatprep.subr.mxu0 0.0
    %382 = vmatpush1.msra.mxu0 %v161
    %383 = vmatprep.subr.mxu0 0.0
    %384 = vmatpush1.msra.mxu0 %v162
    %385 = vmatprep.subr.mxu0 0.0
    %386 = vmatpush1.msra.mxu0 %v163
    %387 = vmatprep.subr.mxu0 0.0
    %388 = vmatpush1.msra.mxu0 %v164
    %389 = vmatprep.subr.mxu0 0.0
    %390 = vmatpush1.msra.mxu0 %v165
    %391 = vmatprep.subr.mxu0 0.0
    %392 = vmatpush1.msra.mxu0 %v166
    %393 = vmatprep.subr.mxu0 0.0
    %394 = vmatpush1.msra.mxu0 %v167
    %395 = vmatprep.subr.mxu0 0.0
    %396 = vmatpush1.msra.mxu0 %v168
    %397 = vmatprep.subr.mxu0 0.0
    %398 = vmatpush1.msra.mxu0 %v169
    %399 = vmatprep.subr.mxu0 0.0
    %400 = vmatpush1.msra.mxu0 %v170
    %401 = vmatprep.subr.mxu0 0.0
    %402 = vmatpush1.msra.mxu0 %v171
    %403 = vmatprep.subr.mxu0 0.0
    %404 = vmatpush1.msra.mxu0 %v172
    %405 = vmatprep.subr.mxu0 0.0
    %406 = vmatpush1.msra.mxu0 %v173
    %407 = vmatprep.subr.mxu0 0.0
    %408 = vmatpush1.msra.mxu0 %v174
    %409 = vmatprep.subr.mxu0 0.0
    %410 = vmatpush1.msra.mxu0 %v175
    %411 = vmatprep.subr.mxu0 0.0
    %412 = vmatpush1.msra.mxu0 %v176
    %413 = vmatprep.mubr.f32.mxu0 %v78
    %414 = vmatmul.mubr.f32.gmra.mrb[0].mxu0 %v77
    %v415 = vpop.f32.mrb[0].mxu0
    %v416 = vadd.f32 %v346, %v415
    %v417 = vpop.f32.mrb[0].mxu0
    %418 = vdwg.mxu0
    %419 = vmatprep.subr.mxu0 0.0
    %420 = vmatpush1.msra.mxu0 %v177
    %421 = vmatprep.subr.mxu0 0.0
    %422 = vmatpush1.msra.mxu0 %v178
    %423 = vmatprep.subr.mxu0 0.0
    %424 = vmatpush1.msra.mxu0 %v179
    %425 = vmatprep.subr.mxu0 0.0
    %426 = vmatpush1.msra.mxu0 %v180
    %427 = vmatprep.subr.mxu0 0.0
    %428 = vmatpush1.msra.mxu0 %v181
    %429 = vmatprep.subr.mxu0 0.0
    %430 = vmatpush1.msra.mxu0 %v182
    %431 = vmatprep.subr.mxu0 0.0
    %432 = vmatpush1.msra.mxu0 %v183
    %433 = vmatprep.subr.mxu0 0.0
    %434 = vmatpush1.msra.mxu0 %v184
    %435 = vmatprep.subr.mxu0 0.0
    %436 = vmatpush1.msra.mxu0 %v185
    %437 = vmatprep.subr.mxu0 0.0
    %438 = vmatpush1.msra.mxu0 %v186
    %439 = vmatprep.subr.mxu0 0.0
    %440 = vmatpush1.msra.mxu0 %v187
    %441 = vmatprep.subr.mxu0 0.0
    %442 = vmatpush1.msra.mxu0 %v188
    %443 = vmatprep.subr.mxu0 0.0
    %444 = vmatpush1.msra.mxu0 %v189
    %445 = vmatprep.subr.mxu0 0.0
    %446 = vmatpush1.msra.mxu0 %v190
    %447 = vmatprep.subr.mxu0 0.0
    %448 = vmatpush1.msra.mxu0 %v191
    %449 = vmatprep.subr.mxu0 0.0
    %450 = vmatpush1.msra.mxu0 %v192
    %451 = vmatprep.subr.mxu0 0.0
    %452 = vmatpush1.msra.mxu0 %v193
    %453 = vmatprep.subr.mxu0 0.0
    %454 = vmatpush1.msra.mxu0 %v194
    %455 = vmatprep.subr.mxu0 0.0
    %456 = vmatpush1.msra.mxu0 %v195
    %457 = vmatprep.subr.mxu0 0.0
    %458 = vmatpush1.msra.mxu0 %v196
    %459 = vmatprep.subr.mxu0 0.0
    %460 = vmatpush1.msra.mxu0 %v197
    %461 = vmatprep.subr.mxu0 0.0
    %462 = vmatpush1.msra.mxu0 %v198
    %463 = vmatprep.subr.mxu0 0.0
    %464 = vmatpush1.msra.mxu0 %v199
    %465 = vmatprep.subr.mxu0 0.0
    %466 = vmatpush1.msra.mxu0 %v200
    %467 = vmatprep.subr.mxu0 0.0
    %468 = vmatpush1.msra.mxu0 %v201
    %469 = vmatprep.subr.mxu0 0.0
    %470 = vmatpush1.msra.mxu0 %v202
    %471 = vmatprep.subr.mxu0 0.0
    %472 = vmatpush1.msra.mxu0 %v203
    %473 = vmatprep.subr.mxu0 0.0
    %474 = vmatpush1.msra.mxu0 %v204
    %475 = vmatprep.subr.mxu0 0.0
    %476 = vmatpush1.msra.mxu0 %v205
    %477 = vmatprep.subr.mxu0 0.0
    %478 = vmatpush1.msra.mxu0 %v206
    %479 = vmatprep.subr.mxu0 0.0
    %480 = vmatpush1.msra.mxu0 %v207
    %481 = vmatprep.subr.mxu0 0.0
    %482 = vmatpush1.msra.mxu0 %v208
    %483 = vmatprep.mubr.f32.mxu0 %v80
    %484 = vmatmul.mubr.f32.gmra.mrb[0].mxu0 %v79
    %v485 = vpop.f32.mrb[0].mxu0
    %v486 = vadd.f32 %v416, %v485
    %v487 = vpop.f32.mrb[0].mxu0
    %488 = vdwg.mxu0
    %v489 = vadd.f32 %v72, %v486
    %v490 = vld [vmem:[%s3] sm:$0x1]
    %v491 = vmax.f32 %v489, 0.0
    %v493 = vlaneseq
    %v494 = vshrl.u32 %v493, 7
    %v495 = vsub.s32 0, %v494
    %v496 = vrot.slane %v490, %v495
    %v498 = vmul.f32 %v491, %v496
    %499 = vadd.xlane.f32.xlu0 %v498
    %v500 = vpop.xlane.xlu0 %499
    %vm501 = vcmp.gt.f32.partialorder %v489, 0.0
    %v502 = vsel %vm501, 1, 0
    %v503 = vcvt.s32.f32 %v502
    %v504 = vld [vmem:[#allocation8] sm:$0xff]
    %v505 = vld [vmem:[#allocation8 + $0x8] sm:$0xff]
    %v506 = vld [vmem:[#allocation8 + $0x10] sm:$0xff]
    %v507 = vld [vmem:[#allocation8 + $0x18] sm:$0xff]
    %v508 = vld [vmem:[#allocation8 + $0x20] sm:$0xff]
    %v509 = vld [vmem:[#allocation8 + $0x28] sm:$0xff]
    %v510 = vld [vmem:[#allocation8 + $0x30] sm:$0xff]
    %v511 = vld [vmem:[#allocation8 + $0x38] sm:$0xff]
    %v512 = vld [vmem:[#allocation8 + $0x40] sm:$0xff]
    %v513 = vld [vmem:[#allocation8 + $0x48] sm:$0xff]
    %v514 = vld [vmem:[#allocation8 + $0x50] sm:$0xff]
    %v515 = vld [vmem:[#allocation8 + $0x58] sm:$0xff]
    %v516 = vld [vmem:[#allocation8 + $0x60] sm:$0xff]
    %v517 = vld [vmem:[#allocation8 + $0x68] sm:$0xff]
    %v518 = vld [vmem:[#allocation8 + $0x70] sm:$0xff]
    %v519 = vld [vmem:[#allocation8 + $0x78] sm:$0xff]
    %520 = vmatprep.subr.mxu0 0.0
    %521 = vmatpush1.msra.mxu0 %v504
    %522 = vmatprep.subr.mxu0 0.0
    %523 = vmatpush1.msra.mxu0 %v505
    %524 = vmatprep.subr.mxu0 0.0
    %525 = vmatpush1.msra.mxu0 %v506
    %526 = vmatprep.subr.mxu0 0.0
    %527 = vmatpush1.msra.mxu0 %v507
    %528 = vmatprep.subr.mxu0 0.0
    %529 = vmatpush1.msra.mxu0 %v508
    %530 = vmatprep.subr.mxu0 0.0
    %531 = vmatpush1.msra.mxu0 %v509
    %532 = vmatprep.subr.mxu0 0.0
    %533 = vmatpush1.msra.mxu0 %v510
    %534 = vmatprep.subr.mxu0 0.0
    %535 = vmatpush1.msra.mxu0 %v511
    %536 = vmatprep.subr.mxu0 0.0
    %537 = vmatpush1.msra.mxu0 %v512
    %538 = vmatprep.subr.mxu0 0.0
    %539 = vmatpush1.msra.mxu0 %v513
    %540 = vmatprep.subr.mxu0 0.0
    %541 = vmatpush1.msra.mxu0 %v514
    %542 = vmatprep.subr.mxu0 0.0
    %543 = vmatpush1.msra.mxu0 %v515
    %544 = vmatprep.subr.mxu0 0.0
    %545 = vmatpush1.msra.mxu0 %v516
    %546 = vmatprep.subr.mxu0 0.0
    %547 = vmatpush1.msra.mxu0 %v517
    %548 = vmatprep.subr.mxu0 0.0
    %549 = vmatpush1.msra.mxu0 %v518
    %550 = vmatprep.subr.mxu0 0.0
    %551 = vmatpush1.msra.mxu0 %v519
    %552 = vmatprep.subr.mxu0 0.0
    %553 = vmatpush1.msra.mxu0 0.0
    %554 = vmatprep.subr.mxu0 0.0
    %555 = vmatpush1.msra.mxu0 0.0
    %556 = vmatprep.subr.mxu0 0.0
    %557 = vmatpush1.msra.mxu0 0.0
    %558 = vmatprep.subr.mxu0 0.0
    %559 = vmatpush1.msra.mxu0 0.0
    %560 = vmatprep.subr.mxu0 0.0
    %561 = vmatpush1.msra.mxu0 0.0
    %562 = vmatprep.subr.mxu0 0.0
    %563 = vmatpush1.msra.mxu0 0.0
    %564 = vmatprep.subr.mxu0 0.0
    %565 = vmatpush1.msra.mxu0 0.0
    %566 = vmatprep.subr.mxu0 0.0
    %567 = vmatpush1.msra.mxu0 0.0
    %568 = vmatprep.subr.mxu0 0.0
    %569 = vmatpush1.msra.mxu0 0.0
    %570 = vmatprep.subr.mxu0 0.0
    %571 = vmatpush1.msra.mxu0 0.0
    %572 = vmatprep.subr.mxu0 0.0
    %573 = vmatpush1.msra.mxu0 0.0
    %574 = vmatprep.subr.mxu0 0.0
    %575 = vmatpush1.msra.mxu0 0.0
    %576 = vmatprep.subr.mxu0 0.0
    %577 = vmatpush1.msra.mxu0 0.0
    %578 = vmatprep.subr.mxu0 0.0
    %579 = vmatpush1.msra.mxu0 0.0
    %580 = vmatprep.subr.mxu0 0.0
    %581 = vmatpush1.msra.mxu0 0.0
    %582 = vmatprep.subr.mxu0 0.0
    %583 = vmatpush1.msra.mxu0 0.0
    %584 = vmatprep.mubr.f32.mxu0 0.0
    %585 = vmatmul.mubr.f32.gmra.mrb[0].mxu0 %v503
    %v586 = vpop.f32.mrb[0].mxu0
    %v587 = vadd.f32 0.0, %v586
    %v588 = vpop.f32.mrb[0].mxu0
    %589 = vdwg.mxu0
    %v590 = vmul.f32 %v587, %v503
    %591 = vadd.xlane.f32.xlu0 %v590
    %v592 = vpop.xlane.xlu0 %591
    %v593 = vlaneseq
    %v594 = vand.u32 %v593, 127
    %vm595 = vcmp.eq.s32.totalorder %v594, 0
    %vm596 = vcmp.eq.s32.totalorder %v594, 1
    %v597 = vsel %vm596, %v592, 0.0
    %v598 = vsel %vm595, %v500, %v597
    %599 = vst [vmem:[#allocation10] sm:$0xff] %v598
    // Predicated region
    $region38: #{tpu_custom_call.1} parent=1 // pred_check
      _
    $region39: #{tpu_custom_call.1} parent=1 // pred_check_branch
      %601 = sbr.rel (0) target = $region41
    $region40: #{tpu_custom_call.1} parent=1 // pred_region
      %s603 = ssub.s32 128, 128
      %604 = vsyncadd [#allocation4], %s603
      %s606 = sshll.u32 [#allocation10], 4
      %s607 = int_to_ptr.vmem [resolvable:$true] %s606
      %609 = dma.vmem_to_hbm [thread:$0]  %s607, 128, %s5, [#allocation4]
    $region41: #{tpu_custom_call.1} parent=1 // pred_fallthru
      _
    // Predicated region
    $region42: #{tpu_custom_call.1} parent=1 // pred_check
      _
    $region43: #{tpu_custom_call.1} parent=1 // pred_check_branch
      %611 = sbr.rel (0) target = $region45
    $region44: #{tpu_custom_call.1} parent=1 // pred_region
      %612 = dma.done [#allocation4], 128
    $region45: #{tpu_custom_call.1} parent=1 // pred_fallthru
      _
    %613 = vsyncpa [#allocation3], 1
    %614 = vsyncpa [#allocation6], 1
    %615 = vsyncpa [#allocation9], 1
    %616 = vsyncpa [#allocation4], 1

</llo_original>
